<compile_context>
chip_gen: v7x
topology: tpu7x:2x2x1
jax: 0.10.0
libtpu: 0.0.40
codegen_flags: <defaults>
</compile_context>

<pallas_src>
import jax
import jax.numpy as jnp
from jax.experimental import pallas as pl
from jax.experimental.pallas import tpu as pltpu


# ----------------------------------------------------------------------------
# Kernel
# ----------------------------------------------------------------------------
def _attention_kernel(enc_ref, dec_ref, out_ref, m_sc, l_sc, acc_sc):
    # enc_ref: (bt, le_t, H), dec_ref: (bt, ld_t, H)
    # out_ref: (bt, ld_t*H) lane-dense slab  OR  (bt, ld_t, H)
    # scratch: m_sc/l_sc (bt, ld_t, 1) f32, acc_sc (bt, ld_t, H) f32
    e_idx = pl.program_id(2)

    @pl.when(e_idx == 0)
    def _():
        m_sc[...] = jnp.full_like(m_sc, -jnp.inf)
        l_sc[...] = jnp.zeros_like(l_sc)
        acc_sc[...] = jnp.zeros_like(acc_sc)

    enc = enc_ref[...]
    dec = dec_ref[...]

    # scores[b, d, e] = sum_h dec[b,d,h] * enc[b,e,h]  ==  a_t[b, e, d]
    scores = jnp.einsum("bdh,beh->bde", dec, enc,
                        preferred_element_type=jnp.float32)      # (bt, ld_t, le_t)

    # Online softmax over Le (== dim=1 of the original (Le, Ld) score matrix).
    m_prev = m_sc[...]
    m_new = jnp.maximum(m_prev, jnp.max(scores, axis=-1, keepdims=True))
    alpha = jnp.exp(m_prev - m_new)
    p = jnp.exp(scores - m_new)

    l_sc[...] = alpha * l_sc[...] + jnp.sum(p, axis=-1, keepdims=True)
    # Unnormalized PV matmul: keep MXU operands in the input dtype, f32 acc.
    acc_sc[...] = alpha * acc_sc[...] + jnp.einsum(
        "bde,beh->bdh", p.astype(enc.dtype), enc,
        preferred_element_type=jnp.float32)
    m_sc[...] = m_new

    @pl.when(e_idx == pl.num_programs(2) - 1)
    def _():
        # Normalize after the matmul; reciprocal goes to the EUP slot.
        c = acc_sc[...] * pl.reciprocal(l_sc[...], approx=True)
        out_ref[...] = c.reshape(out_ref.shape).astype(out_ref.dtype)


# ----------------------------------------------------------------------------
# Generation-aware tile selection
# ----------------------------------------------------------------------------
def _tpu_generation_params():
    """Return (vmem_capacity_bytes, num_tensorcores_per_chip), conservatively."""
    vmem_capacity = 64 * 1024 * 1024  # conservative default (v7x per-TC size)
    num_tc = 1
    try:
        info = pltpu.get_tpu_info()
        cap = getattr(info, "vmem_capacity_bytes", None)
        if cap:
            vmem_capacity = int(cap)
    except Exception:
        pass
    try:
        kind = jax.devices()[0].device_kind.lower()
        if "v7" in kind:
            num_tc = 2
    except Exception:
        pass
    if num_tc >= 2:
        # v7x has 64 MiB per-TC even if a query reports per-chip capacity.
        vmem_capacity = min(vmem_capacity, 64 * 1024 * 1024)
    return vmem_capacity, num_tc


def _tile_bytes(rows, cols, itemsize):
    """Bytes of a (rows, cols) VMEM tile including (sublane, lane) padding."""
    sublane = 8 * max(1, 4 // max(itemsize, 1))
    r = ((rows + sublane - 1) // sublane) * sublane
    c = ((cols + 127) // 128) * 128
    return r * c * itemsize


def _step_vmem_bytes(bt, ld_t, le_t, H, itemsize):
    """Conservative per-grid-step VMEM use: double-buffered blocks + scratch +
    f32 score/prob temporaries (all with lane padding of H < 128 rows)."""
    enc_in = 2 * bt * _tile_bytes(le_t, H, itemsize)
    dec_in = 2 * bt * _tile_bytes(ld_t, H, itemsize)
    out_b = 2 * bt * _tile_bytes(ld_t, H, itemsize)
    scratch = bt * (2 * _tile_bytes(ld_t, 1, 4) + _tile_bytes(ld_t, H, 4))
    interm = bt * (2 * _tile_bytes(ld_t, le_t, 4)       # f32 scores + probs
                   + _tile_bytes(ld_t, le_t, itemsize)   # probs cast for MXU
                   + 2 * _tile_bytes(ld_t, H, 4))        # f32 temporaries
    return enc_in + dec_in + out_b + scratch + interm


def _tile_options(n):
    """Tile sizes for a dim of extent n: full extent or multiples of 8 that
    divide n (satisfies the (8,128) sublane constraint), descending."""
    opts = {n}
    d = 8
    while d < n:
        if n % d == 0:
            opts.add(d)
        d += 8
    return sorted(opts, reverse=True)


def _choose_tiles(B, Le, Ld, H, itemsize, block_budget, num_tc):
    le_opts = _tile_options(Le)
    ld_opts = _tile_options(Ld)
    b_opts = [d for d in range(B, 0, -1) if B % d == 0]

    best, best_key = None, None
    for le_t in le_opts:
        for ld_t in ld_opts:
            for bt in b_opts:
                if _step_vmem_bytes(bt, ld_t, le_t, H, itemsize) > block_budget:
                    continue
                n_parallel = (B // bt) * (Ld // ld_t)
                # Single-TC (v5e/v6e): biggest tiles win.  Multi-TC (v7x):
                # prefer >= 2 parallel grid steps per TensorCore.
                enough_par = (num_tc == 1) or (n_parallel >= 2 * num_tc)
                key = (le_t, enough_par, bt * ld_t, bt)
                if best_key is None or key > best_key:
                    best, best_key = (bt, ld_t, le_t), key
    if best is None:
        # Nothing fits the budget (degenerate shapes): fall back to the
        # smallest legal tiles and let the compiler do its best.
        best = (1, ld_opts[-1], le_opts[-1])
    return best


# ----------------------------------------------------------------------------
# Wrapper
# ----------------------------------------------------------------------------
def attention(encoder, decoder):
    """encoder: (B, Le, H), decoder: (B, Ld, H) -> (B, Ld, H)"""
    B, Le, H = encoder.shape
    Bd, Ld, Hd = decoder.shape
    assert B == Bd and H == Hd

    itemsize = jnp.dtype(encoder.dtype).itemsize

    vmem_capacity, num_tc = _tpu_generation_params()
    vmem_limit = min(int(0.75 * vmem_capacity), 96 * 1024 * 1024)
    vmem_limit = max(vmem_limit, 16 * 1024 * 1024)
    block_budget = int(0.6 * vmem_limit)

    bt, ld_t, le_t = _choose_tiles(B, Le, Ld, H, itemsize, block_budget, num_tc)
    grid = (B // bt, Ld // ld_t, Le // le_t)

    # Lane-dense output slab when legal: removes masked vst.msk partial stores
    # for H < 128 and the 4x lane padding of the output block in VMEM.
    flatten_out = ((ld_t * H) % 128 == 0) and (bt % 8 == 0 or bt == B)
    if flatten_out:
        out_shape = jax.ShapeDtypeStruct((B, Ld * H), encoder.dtype)
        out_spec = pl.BlockSpec((bt, ld_t * H), lambda b, d, e: (b, d))
    else:
        out_shape = jax.ShapeDtypeStruct((B, Ld, H), encoder.dtype)
        out_spec = pl.BlockSpec((bt, ld_t, H), lambda b, d, e: (b, d, 0))

    cost = pl.CostEstimate(
        flops=4 * B * Ld * Le * H,                    # two matmuls
        transcendentals=B * Ld * Le + B * Ld,         # exp + reciprocal
        bytes_accessed=(B * Le * H * (Ld // ld_t) + 2 * B * Ld * H) * itemsize,
    )

    out = pl.pallas_call(
        _attention_kernel,
        out_shape=out_shape,
        grid=grid,
        in_specs=[
            pl.BlockSpec((bt, le_t, H), lambda b, d, e: (b, e, 0)),  # encoder
            pl.BlockSpec((bt, ld_t, H), lambda b, d, e: (b, d, 0)),  # decoder
        ],
        out_specs=out_spec,
        scratch_shapes=[
            pltpu.VMEM((bt, ld_t, 1), jnp.float32),   # running max m
            pltpu.VMEM((bt, ld_t, 1), jnp.float32),   # running denom l
            pltpu.VMEM((bt, ld_t, H), jnp.float32),   # unnormalized accumulator
        ],
        compiler_params=pltpu.CompilerParams(
            dimension_semantics=("parallel", "parallel", "arbitrary"),
            vmem_limit_bytes=vmem_limit,
        ),
        cost_estimate=cost,
    )(encoder, decoder)

    if flatten_out:
        out = out.reshape(B, Ld, H)
    return out


# ----------------------------------------------------------------------------
# Reference + test
# ----------------------------------------------------------------------------
def _reference(encoder, decoder):
    a_t = jnp.einsum("beh,bdh->bed", encoder, decoder)
    sa_t = jax.nn.softmax(a_t, axis=1)
    c_t = jnp.einsum("bed,beh->bdh", sa_t, encoder)
    return c_t


if __name__ == "__main__":
    key = jax.random.PRNGKey(0)
    k1, k2 = jax.random.split(key)
    B, Le, Ld, H = 2, 16, 8, 32
    encoder = jax.random.normal(k1, (B, Le, H), dtype=jnp.float32)
    decoder = jax.random.normal(k2, (B, Ld, H), dtype=jnp.float32)

    out = jax.block_until_ready(attention(encoder, decoder))
    ref = _reference(encoder, decoder)

    assert out.shape == (B, Ld, H)
    # approx=True reciprocal trades a few mantissa bits for an EUP-slot op.
    assert jnp.allclose(out, ref, atol=1e-3, rtol=1e-2)

    print("KERNEL_OK")
</pallas_src>

<mosaic_0001>
module attributes {stable_mosaic.version = 11 : i64} {
  func.func @_attention_kernel(%arg0: i32, %arg1: i32, %arg2: i32, %arg3: memref<2x16x32xf32, #tpu.memory_space<vmem>>, %arg4: memref<2x8x32xf32, #tpu.memory_space<vmem>>, %arg5: memref<2x256xf32, #tpu.memory_space<vmem>>, %arg6: memref<2x8x1xf32, #tpu.memory_space<vmem>>, %arg7: memref<2x8x1xf32, #tpu.memory_space<vmem>>, %arg8: memref<2x8x32xf32, #tpu.memory_space<vmem>>) attributes {dimension_semantics = [#tpu.dimension_semantics<parallel>, #tpu.dimension_semantics<parallel>, #tpu.dimension_semantics<arbitrary>], iteration_bounds = array<i64: 1, 1, 1>, scalar_prefetch = 0 : i64, scratch_operands = 3 : i64, tpu.core_type = #tpu.core_type<tc>, window_params = [{transform_indices = @transform_0, window_bounds = array<i64: 2, 16, 32>}, {transform_indices = @transform_1, window_bounds = array<i64: 2, 8, 32>}, {transform_indices = @transform_2, window_bounds = array<i64: 2, 256>}]} {
    %c0_i32 = arith.constant 0 : i32
    %0 = arith.cmpi eq, %arg2, %c0_i32 : i32
    %1 = arith.extui %0 : i1 to i32
    %c0_i32_0 = arith.constant 0 : i32
    %2 = arith.cmpi ne, %1, %c0_i32_0 : i32
    scf.if %2 {
      %cst_29 = arith.constant 0xFF800000 : f32
      %31 = vector.broadcast %cst_29 : f32 to vector<2x8x1xf32>
      %c0_30 = arith.constant 0 : index
      %c0_31 = arith.constant 0 : index
      %c0_32 = arith.constant 0 : index
      %32 = vector.load %arg6[%c0_30, %c0_31, %c0_32] : memref<2x8x1xf32, #tpu.memory_space<vmem>>, vector<2x8x1xf32>
      tpu.vector_store %arg6[%c0_30, %c0_31, %c0_32], %31 {strides = array<i32>} : memref<2x8x1xf32, #tpu.memory_space<vmem>>, vector<2x8x1xf32>,
      %cst_33 = arith.constant 0.000000e+00 : f32
      %33 = vector.broadcast %cst_33 : f32 to vector<2x8x1xf32>
      %c0_34 = arith.constant 0 : index
      %c0_35 = arith.constant 0 : index
      %c0_36 = arith.constant 0 : index
      %34 = vector.load %arg7[%c0_34, %c0_35, %c0_36] : memref<2x8x1xf32, #tpu.memory_space<vmem>>, vector<2x8x1xf32>
      tpu.vector_store %arg7[%c0_34, %c0_35, %c0_36], %33 {strides = array<i32>} : memref<2x8x1xf32, #tpu.memory_space<vmem>>, vector<2x8x1xf32>,
      %cst_37 = arith.constant 0.000000e+00 : f32
      %35 = vector.broadcast %cst_37 : f32 to vector<2x8x32xf32>
      %c0_38 = arith.constant 0 : index
      %c0_39 = arith.constant 0 : index
      %c0_40 = arith.constant 0 : index
      %36 = vector.load %arg8[%c0_38, %c0_39, %c0_40] : memref<2x8x32xf32, #tpu.memory_space<vmem>>, vector<2x8x32xf32>
      tpu.vector_store %arg8[%c0_38, %c0_39, %c0_40], %35 {strides = array<i32>} : memref<2x8x32xf32, #tpu.memory_space<vmem>>, vector<2x8x32xf32>,
    } else {
    }
    %c0 = arith.constant 0 : index
    %c0_1 = arith.constant 0 : index
    %c0_2 = arith.constant 0 : index
    %3 = vector.load %arg3[%c0, %c0_1, %c0_2] : memref<2x16x32xf32, #tpu.memory_space<vmem>>, vector<2x16x32xf32>
    %c0_3 = arith.constant 0 : index
    %c0_4 = arith.constant 0 : index
    %c0_5 = arith.constant 0 : index
    %4 = vector.load %arg4[%c0_3, %c0_4, %c0_5] : memref<2x8x32xf32, #tpu.memory_space<vmem>>, vector<2x8x32xf32>
    "tpu.trace_start"() <{level = 10 : i32, message = "bdh,beh->bde"}> : () -> ()
    %cst = arith.constant dense<0.000000e+00> : vector<2x8x16xf32>
    %5 = tpu.matmul %4, %3, %cst {dimension_numbers = #tpu.dot_dimension_numbers<[2], [2], [1], [1], [0, 0, 0, 1, 1, 1], [0], [0]>} : vector<2x8x32xf32>, vector<2x16x32xf32>, vector<2x8x16xf32> -> vector<2x8x16xf32>
    "tpu.trace_stop"() : () -> ()
    %c0_6 = arith.constant 0 : index
    %c0_7 = arith.constant 0 : index
    %c0_8 = arith.constant 0 : index
    %6 = vector.load %arg6[%c0_6, %c0_7, %c0_8] : memref<2x8x1xf32, #tpu.memory_space<vmem>>, vector<2x8x1xf32>
    %cst_9 = arith.constant dense<0xFF800000> : vector<2x8xf32>
    %7 = vector.multi_reduction <maximumf>, %5, %cst_9 [2] : vector<2x8x16xf32> to vector<2x8xf32>
    %8 = vector.shape_cast %7 : vector<2x8xf32> to vector<2x8x1xf32>
    %9 = arith.maximumf %6, %8 : vector<2x8x1xf32>
    %10 = arith.subf %6, %9 : vector<2x8x1xf32>
    %11 = math.exp %10 : vector<2x8x1xf32>
    %12 = vector.broadcast %9 : vector<2x8x1xf32> to vector<2x8x16xf32>
    %13 = arith.subf %5, %12 : vector<2x8x16xf32>
    %14 = math.exp %13 : vector<2x8x16xf32>
    %c0_10 = arith.constant 0 : index
    %c0_11 = arith.constant 0 : index
    %c0_12 = arith.constant 0 : index
    %15 = vector.load %arg7[%c0_10, %c0_11, %c0_12] : memref<2x8x1xf32, #tpu.memory_space<vmem>>, vector<2x8x1xf32>
    %16 = arith.mulf %11, %15 : vector<2x8x1xf32>
    %cst_13 = arith.constant dense<0.000000e+00> : vector<2x8xf32>
    %17 = vector.multi_reduction <add>, %14, %cst_13 [2] : vector<2x8x16xf32> to vector<2x8xf32>
    %18 = vector.shape_cast %17 : vector<2x8xf32> to vector<2x8x1xf32>
    %19 = arith.addf %16, %18 : vector<2x8x1xf32>
    %c0_14 = arith.constant 0 : index
    %c0_15 = arith.constant 0 : index
    %c0_16 = arith.constant 0 : index
    %20 = vector.load %arg7[%c0_14, %c0_15, %c0_16] : memref<2x8x1xf32, #tpu.memory_space<vmem>>, vector<2x8x1xf32>
    tpu.vector_store %arg7[%c0_14, %c0_15, %c0_16], %19 {strides = array<i32>} : memref<2x8x1xf32, #tpu.memory_space<vmem>>, vector<2x8x1xf32>,
    %c0_17 = arith.constant 0 : index
    %c0_18 = arith.constant 0 : index
    %c0_19 = arith.constant 0 : index
    %21 = vector.load %arg8[%c0_17, %c0_18, %c0_19] : memref<2x8x32xf32, #tpu.memory_space<vmem>>, vector<2x8x32xf32>
    %22 = vector.broadcast %11 : vector<2x8x1xf32> to vector<2x8x32xf32>
    %23 = arith.mulf %22, %21 : vector<2x8x32xf32>
    "tpu.trace_start"() <{level = 10 : i32, message = "bde,beh->bdh"}> : () -> ()
    %cst_20 = arith.constant dense<0.000000e+00> : vector<2x8x32xf32>
    %24 = tpu.matmul %14, %3, %cst_20 {dimension_numbers = #tpu.dot_dimension_numbers<[2], [1], [1], [2], [0, 0, 0, 1, 1, 2], [0], [0]>} : vector<2x8x16xf32>, vector<2x16x32xf32>, vector<2x8x32xf32> -> vector<2x8x32xf32>
    "tpu.trace_stop"() : () -> ()
    %25 = arith.addf %23, %24 : vector<2x8x32xf32>
    %c0_21 = arith.constant 0 : index
    %c0_22 = arith.constant 0 : index
    %c0_23 = arith.constant 0 : index
    %26 = vector.load %arg8[%c0_21, %c0_22, %c0_23] : memref<2x8x32xf32, #tpu.memory_space<vmem>>, vector<2x8x32xf32>
    tpu.vector_store %arg8[%c0_21, %c0_22, %c0_23], %25 {strides = array<i32>} : memref<2x8x32xf32, #tpu.memory_space<vmem>>, vector<2x8x32xf32>,
    %c0_24 = arith.constant 0 : index
    %c0_25 = arith.constant 0 : index
    %c0_26 = arith.constant 0 : index
    %27 = vector.load %arg6[%c0_24, %c0_25, %c0_26] : memref<2x8x1xf32, #tpu.memory_space<vmem>>, vector<2x8x1xf32>
    tpu.vector_store %arg6[%c0_24, %c0_25, %c0_26], %9 {strides = array<i32>} : memref<2x8x1xf32, #tpu.memory_space<vmem>>, vector<2x8x1xf32>,
    %c0_i32_27 = arith.constant 0 : i32
    %28 = arith.cmpi eq, %arg2, %c0_i32_27 : i32
    %29 = arith.extui %28 : i1 to i32
    %c0_i32_28 = arith.constant 0 : i32
    %30 = arith.cmpi ne, %29, %c0_i32_28 : i32
    scf.if %30 {
      %c0_29 = arith.constant 0 : index
      %c0_30 = arith.constant 0 : index
      %c0_31 = arith.constant 0 : index
      %31 = vector.load %arg8[%c0_29, %c0_30, %c0_31] : memref<2x8x32xf32, #tpu.memory_space<vmem>>, vector<2x8x32xf32>
      %c0_32 = arith.constant 0 : index
      %c0_33 = arith.constant 0 : index
      %c0_34 = arith.constant 0 : index
      %32 = vector.load %arg7[%c0_32, %c0_33, %c0_34] : memref<2x8x1xf32, #tpu.memory_space<vmem>>, vector<2x8x1xf32>
      %33 = tpu.reciprocal %32 {approx = true} : vector<2x8x1xf32> -> vector<2x8x1xf32>
      %34 = vector.broadcast %33 : vector<2x8x1xf32> to vector<2x8x32xf32>
      %35 = arith.mulf %31, %34 : vector<2x8x32xf32>
      %36 = vector.shape_cast %35 : vector<2x8x32xf32> to vector<2x256xf32>
      %c0_35 = arith.constant 0 : index
      %c0_36 = arith.constant 0 : index
      %37 = vector.load %arg5[%c0_35, %c0_36] : memref<2x256xf32, #tpu.memory_space<vmem>>, vector<2x256xf32>
      tpu.vector_store %arg5[%c0_35, %c0_36], %36 {strides = array<i32>} : memref<2x256xf32, #tpu.memory_space<vmem>>, vector<2x256xf32>,
    } else {
    }
    return
  }
  func.func @transform_0(%arg0: i32, %arg1: i32, %arg2: i32) -> (i32, i32, i32) {
    %c0_i32 = arith.constant 0 : i32
    %c0_i32_0 = arith.constant 0 : i32
    return %arg0, %arg2, %c0_i32 : i32, i32, i32
  }
  func.func @transform_1(%arg0: i32, %arg1: i32, %arg2: i32) -> (i32, i32, i32) {
    %c0_i32 = arith.constant 0 : i32
    %c0_i32_0 = arith.constant 0 : i32
    return %arg0, %arg1, %c0_i32 : i32, i32, i32
  }
  func.func @transform_2(%arg0: i32, %arg1: i32, %arg2: i32) -> (i32, i32) {
    %c0_i32 = arith.constant 0 : i32
    return %arg0, %arg1 : i32, i32
  }
}

</mosaic_0001>

<llo_original>
// kernel: tpu_custom_call.1
$region0: #{tpu_custom_call.1}
  #allocation0 [shape = 'u32[]', space=smem, size = 0x4, offset = 0x4, fixed_abs, tag = 'smem constant byte address 0x4 - core index']
  #allocation1 [shape = 'u32[144,128]{1,0:T(1,128)}', space=vmem, size = 0x12000, scoped, tag = 'internal scratch']
  #allocation2 [shape = 'f32[2,8,1]{2,1,0:T(8,128)}', space=vmem, size = 0x2000, scoped, tag = 'scratch operand']
  #allocation3 [shape = 'f32[2,8,1]{2,1,0:T(8,128)}', space=vmem, size = 0x2000, scoped, tag = 'scratch operand']
  #allocation4 [shape = 'f32[2,8,32]{2,1,0:T(8,128)}', space=vmem, size = 0x2000, scoped, tag = 'scratch operand']
  %s0 = inlined_call_operand.hbm [shape: f32[2,16,32], index: 0, kind: input, shape index: {}]
  %s1 = inlined_call_operand.hbm [shape: f32[2,8,32], index: 1, kind: input, shape index: {}]
  %s2 = inlined_call_operand.hbm [shape: f32[2,256], index: 2, kind: output, shape index: {}]
  %s3 = sld [smem:[#allocation0]]
  $region34: #{tpu_custom_call.1} parent=0
    _
  %s5 = ssub.s32 1, %s3
  %s6 = scalar_select 0, %s5, %s3
  $region1: #{tpu_custom_call.1} parent=0
    #allocation5 [shape = 'u8[16384]{0}', space=vmem, size = 0x4000, scoped, tag = 'input window, operand 0, single buffered']
    #allocation6 [shape = 's32[1]{0}', space=sflag, size = 0x4, scoped, tag = 'scoped memory for tpu_custom_call.1']
    #allocation7 [shape = 's32[1]{0}', space=sflag, size = 0x4, scoped, tag = 'scoped memory for tpu_custom_call.1']
    #allocation8 [shape = 'u8[8192]{0}', space=vmem, size = 0x2000, scoped, tag = 'input window, operand 1, single buffered']
    #allocation9 [shape = 's32[1]{0}', space=sflag, size = 0x4, scoped, tag = 'scoped memory for tpu_custom_call.1']
    #allocation10 [shape = 'u8[2048]{0}', space=vmem, size = 0x800, scoped, tag = 'output window, operand 0, single buffered']
    %7 = vsyncpa [#allocation6], 0
    %8 = vsyncpa [#allocation9], 0
    %9 = vsyncpa [#allocation7], 0
    // Predicated region
    $region2: #{tpu_custom_call.1} parent=1 // pred_check
      _
    $region3: #{tpu_custom_call.1} parent=1 // pred_check_branch
      %11 = sbr.rel (0) target = $region5
    $region4: #{tpu_custom_call.1} parent=1 // pred_region
      %s13 = ssub.s32 512, 512
      %14 = vsyncadd [#allocation6], %s13
      %s15 = sshll.u32 [#allocation5], 4
      %s16 = int_to_ptr.vmem [resolvable:$true] %s15
      %21 = dma.hbm_to_vmem [thread:$0]  %s0, 512, %s16, [#allocation6], 128, 128, 8
    $region5: #{tpu_custom_call.1} parent=1 // pred_fallthru
      _
    // Predicated region
    $region6: #{tpu_custom_call.1} parent=1 // pred_check
      _
    $region7: #{tpu_custom_call.1} parent=1 // pred_check_branch
      %23 = sbr.rel (0) target = $region9
    $region8: #{tpu_custom_call.1} parent=1 // pred_region
      %s25 = ssub.s32 256, 256
      %26 = vsyncadd [#allocation9], %s25
      %s27 = sshll.u32 [#allocation8], 4
      %s28 = int_to_ptr.vmem [resolvable:$true] %s27
      %33 = dma.hbm_to_vmem [thread:$0]  %s1, 256, %s28, [#allocation9], 128, 128, 8
    $region9: #{tpu_custom_call.1} parent=1 // pred_fallthru
      _
    // Predicated region
    $region10: #{tpu_custom_call.1} parent=1 // pred_check
      _
    $region11: #{tpu_custom_call.1} parent=1 // pred_check_branch
      %35 = sbr.rel (0) target = $region13
    $region12: #{tpu_custom_call.1} parent=1 // pred_region
      %36 = dma.done [#allocation6], 512
    $region13: #{tpu_custom_call.1} parent=1 // pred_fallthru
      _
    // Predicated region
    $region14: #{tpu_custom_call.1} parent=1 // pred_check
      _
    $region15: #{tpu_custom_call.1} parent=1 // pred_check_branch
      %38 = sbr.rel (0) target = $region17
    $region16: #{tpu_custom_call.1} parent=1 // pred_region
      %39 = dma.done [#allocation9], 256
    $region17: #{tpu_custom_call.1} parent=1 // pred_fallthru
      _
    %p40 = scmp.eq.s32.totalorder 0, 0
    // Predicated region
    $region18: #{tpu_custom_call.1} parent=1 // pred_check
      %p41 = pneg %p40
    $region19: #{tpu_custom_call.1} parent=1 // pred_check_branch
      %43 = sbr.rel (%p41) target = $region21
    $region20: #{tpu_custom_call.1} parent=1 // pred_region
      %vm44 = vcmask 7168
      %45 = vst.msk [vmem:[#allocation2] sm:$0xff] %vm44, -inf
      %46 = vst.msk [vmem:[#allocation2 + $0x8] sm:$0xff] %vm44, -inf
      %47 = vst.msk [vmem:[#allocation3] sm:$0xff] %vm44, 0.0
      %48 = vst.msk [vmem:[#allocation3 + $0x8] sm:$0xff] %vm44, 0.0
      %vm49 = vcmask 261120
      %50 = vst.msk [vmem:[#allocation4] sm:$0xff] %vm49, 0.0
      %51 = vst.msk [vmem:[#allocation4 + $0x8] sm:$0xff] %vm49, 0.0
    $region21: #{tpu_custom_call.1} parent=1 // pred_fallthru
      _
    %v52 = vld [vmem:[#allocation5] sm:$0xff]
    %v53 = vld [vmem:[#allocation5 + $0x8] sm:$0xff]
    %v54 = vld [vmem:[#allocation5 + $0x10] sm:$0xff]
    %v55 = vld [vmem:[#allocation5 + $0x18] sm:$0xff]
    %v56 = vld [vmem:[#allocation8] sm:$0xff]
    %v57 = vld [vmem:[#allocation8 + $0x8] sm:$0xff]
    %vm58 = vcmask 261120
    %v60 = vsel %vm58, %v56, 0
    %v63 = vsel %vm58, %v52, 0
    %v66 = vsel %vm58, %v53, 0
    %68 = vmatprep.subr.mxu0 0.0
    %69 = vmatpush1.xpose.msra.mxu0 %v63
    %70 = vmatprep.subr.mxu0 0.0
    %71 = vmatpush1.xpose.msra.mxu0 %v66
    %72 = vmatprep.subr.mxu0 0.0
    %73 = vmatpush1.xpose.msra.mxu0 0.0
    %74 = vmatprep.subr.mxu0 0.0
    %75 = vmatpush1.xpose.msra.mxu0 0.0
    %76 = vmatprep.subr.mxu0 0.0
    %77 = vmatpush1.xpose.msra.mxu0 0.0
    %78 = vmatprep.subr.mxu0 0.0
    %79 = vmatpush1.xpose.msra.mxu0 0.0
    %80 = vmatprep.subr.mxu0 0.0
    %81 = vmatpush1.xpose.msra.mxu0 0.0
    %82 = vmatprep.subr.mxu0 0.0
    %83 = vmatpush1.xpose.msra.mxu0 0.0
    %84 = vmatprep.subr.mxu0 0.0
    %85 = vmatpush1.xpose.msra.mxu0 0.0
    %86 = vmatprep.subr.mxu0 0.0
    %87 = vmatpush1.xpose.msra.mxu0 0.0
    %88 = vmatprep.subr.mxu0 0.0
    %89 = vmatpush1.xpose.msra.mxu0 0.0
    %90 = vmatprep.subr.mxu0 0.0
    %91 = vmatpush1.xpose.msra.mxu0 0.0
    %92 = vmatprep.subr.mxu0 0.0
    %93 = vmatpush1.xpose.msra.mxu0 0.0
    %94 = vmatprep.subr.mxu0 0.0
    %95 = vmatpush1.xpose.msra.mxu0 0.0
    %96 = vmatprep.subr.mxu0 0.0
    %97 = vmatpush1.xpose.msra.mxu0 0.0
    %98 = vmatprep.subr.mxu0 0.0
    %99 = vmatpush1.xpose.msra.mxu0 0.0
    %100 = vmatprep.subr.mxu0 0.0
    %101 = vmatpush1.xpose.msra.mxu0 0.0
    %102 = vmatprep.subr.mxu0 0.0
    %103 = vmatpush1.xpose.msra.mxu0 0.0
    %104 = vmatprep.subr.mxu0 0.0
    %105 = vmatpush1.xpose.msra.mxu0 0.0
    %106 = vmatprep.subr.mxu0 0.0
    %107 = vmatpush1.xpose.msra.mxu0 0.0
    %108 = vmatprep.subr.mxu0 0.0
    %109 = vmatpush1.xpose.msra.mxu0 0.0
    %110 = vmatprep.subr.mxu0 0.0
    %111 = vmatpush1.xpose.msra.mxu0 0.0
    %112 = vmatprep.subr.mxu0 0.0
    %113 = vmatpush1.xpose.msra.mxu0 0.0
    %114 = vmatprep.subr.mxu0 0.0
    %115 = vmatpush1.xpose.msra.mxu0 0.0
    %116 = vmatprep.subr.mxu0 0.0
    %117 = vmatpush1.xpose.msra.mxu0 0.0
    %118 = vmatprep.subr.mxu0 0.0
    %119 = vmatpush1.xpose.msra.mxu0 0.0
    %120 = vmatprep.subr.mxu0 0.0
    %121 = vmatpush1.xpose.msra.mxu0 0.0
    %122 = vmatprep.subr.mxu0 0.0
    %123 = vmatpush1.xpose.msra.mxu0 0.0
    %124 = vmatprep.subr.mxu0 0.0
    %125 = vmatpush1.xpose.msra.mxu0 0.0
    %126 = vmatprep.subr.mxu0 0.0
    %127 = vmatpush1.xpose.msra.mxu0 0.0
    %128 = vmatprep.subr.mxu0 0.0
    %129 = vmatpush1.xpose.msra.mxu0 0.0
    %130 = vmatprep.subr.mxu0 0.0
    %131 = vmatpush1.xpose.msra.mxu0 0.0
    %132 = vmatprep.mubr.f32.mxu0 0.0
    %133 = vmatmul.mubr.f32.gmra.mrb[0].mxu0 %v60
    %v134 = vpop.f32.mrb[0].mxu0
    %v135 = vadd.f32 0.0, %v134
    %v136 = vpop.f32.mrb[0].mxu0
    %137 = vdwg.mxu0
    %v139 = vsel %vm58, %v57, 0
    %v142 = vsel %vm58, %v54, 0
    %v145 = vsel %vm58, %v55, 0
    %147 = vmatprep.subr.mxu0 0.0
    %148 = vmatpush1.xpose.msra.mxu0 %v142
    %149 = vmatprep.subr.mxu0 0.0
    %150 = vmatpush1.xpose.msra.mxu0 %v145
    %151 = vmatprep.subr.mxu0 0.0
    %152 = vmatpush1.xpose.msra.mxu0 0.0
    %153 = vmatprep.subr.mxu0 0.0
    %154 = vmatpush1.xpose.msra.mxu0 0.0
    %155 = vmatprep.subr.mxu0 0.0
    %156 = vmatpush1.xpose.msra.mxu0 0.0
    %157 = vmatprep.subr.mxu0 0.0
    %158 = vmatpush1.xpose.msra.mxu0 0.0
    %159 = vmatprep.subr.mxu0 0.0
    %160 = vmatpush1.xpose.msra.mxu0 0.0
    %161 = vmatprep.subr.mxu0 0.0
    %162 = vmatpush1.xpose.msra.mxu0 0.0
    %163 = vmatprep.subr.mxu0 0.0
    %164 = vmatpush1.xpose.msra.mxu0 0.0
    %165 = vmatprep.subr.mxu0 0.0
    %166 = vmatpush1.xpose.msra.mxu0 0.0
    %167 = vmatprep.subr.mxu0 0.0
    %168 = vmatpush1.xpose.msra.mxu0 0.0
    %169 = vmatprep.subr.mxu0 0.0
    %170 = vmatpush1.xpose.msra.mxu0 0.0
    %171 = vmatprep.subr.mxu0 0.0
    %172 = vmatpush1.xpose.msra.mxu0 0.0
    %173 = vmatprep.subr.mxu0 0.0
    %174 = vmatpush1.xpose.msra.mxu0 0.0
    %175 = vmatprep.subr.mxu0 0.0
    %176 = vmatpush1.xpose.msra.mxu0 0.0
    %177 = vmatprep.subr.mxu0 0.0
    %178 = vmatpush1.xpose.msra.mxu0 0.0
    %179 = vmatprep.subr.mxu0 0.0
    %180 = vmatpush1.xpose.msra.mxu0 0.0
    %181 = vmatprep.subr.mxu0 0.0
    %182 = vmatpush1.xpose.msra.mxu0 0.0
    %183 = vmatprep.subr.mxu0 0.0
    %184 = vmatpush1.xpose.msra.mxu0 0.0
    %185 = vmatprep.subr.mxu0 0.0
    %186 = vmatpush1.xpose.msra.mxu0 0.0
    %187 = vmatprep.subr.mxu0 0.0
    %188 = vmatpush1.xpose.msra.mxu0 0.0
    %189 = vmatprep.subr.mxu0 0.0
    %190 = vmatpush1.xpose.msra.mxu0 0.0
    %191 = vmatprep.subr.mxu0 0.0
    %192 = vmatpush1.xpose.msra.mxu0 0.0
    %193 = vmatprep.subr.mxu0 0.0
    %194 = vmatpush1.xpose.msra.mxu0 0.0
    %195 = vmatprep.subr.mxu0 0.0
    %196 = vmatpush1.xpose.msra.mxu0 0.0
    %197 = vmatprep.subr.mxu0 0.0
    %198 = vmatpush1.xpose.msra.mxu0 0.0
    %199 = vmatprep.subr.mxu0 0.0
    %200 = vmatpush1.xpose.msra.mxu0 0.0
    %201 = vmatprep.subr.mxu0 0.0
    %202 = vmatpush1.xpose.msra.mxu0 0.0
    %203 = vmatprep.subr.mxu0 0.0
    %204 = vmatpush1.xpose.msra.mxu0 0.0
    %205 = vmatprep.subr.mxu0 0.0
    %206 = vmatpush1.xpose.msra.mxu0 0.0
    %207 = vmatprep.subr.mxu0 0.0
    %208 = vmatpush1.xpose.msra.mxu0 0.0
    %209 = vmatprep.subr.mxu0 0.0
    %210 = vmatpush1.xpose.msra.mxu0 0.0
    %211 = vmatprep.mubr.f32.mxu0 0.0
    %212 = vmatmul.mubr.f32.gmra.mrb[0].mxu0 %v139
    %v213 = vpop.f32.mrb[0].mxu0
    %v214 = vadd.f32 0.0, %v213
    %v215 = vpop.f32.mrb[0].mxu0
    %216 = vdwg.mxu0
    %v217 = vld [vmem:[#allocation2] sm:$0xff]
    %v218 = vld [vmem:[#allocation2 + $0x8] sm:$0xff]
    %vm219 = vcmask 130048
    %v220 = vsel %vm219, %v135, -inf
    %221 = vmax.xlane.f32.xlu0 %v220
    %v222 = vpop.xlane.xlu0 %221
    %v223 = vsel %vm219, %v214, -inf
    %224 = vmax.xlane.f32.xlu0 %v223
    %v225 = vpop.xlane.xlu0 %224
    %v226 = vmax.f32 %v217, %v222
    %v227 = vmax.f32 %v218, %v225
    %v228 = vsub.f32 %v217, %v226
    %v229 = vsub.f32 %v218, %v227
    %v230 = vmul.f32 %v228, 1.442695
    %v231 = vpow.pop %v230
    %v232 = vmul.f32 %v229, 1.442695
    %v233 = vpow.pop %v232
    %235 = vset.pattern.permute.xlu0 0
    %236 = vperm.xlu0 %235, %v226
    %v237 = vpop.permute.xlu0 %236
    %240 = vset.pattern.permute.xlu0 0
    %241 = vperm.xlu0 %240, %v227
    %v242 = vpop.permute.xlu0 %241
    %v244 = vsub.f32 %v135, %v237
    %v245 = vsub.f32 %v214, %v242
    %v246 = vmul.f32 %v244, 1.442695
    %v247 = vpow.pop %v246
    %v248 = vmul.f32 %v245, 1.442695
    %v249 = vpow.pop %v248
    %v250 = vld [vmem:[#allocation3] sm:$0xff]
    %v251 = vld [vmem:[#allocation3 + $0x8] sm:$0xff]
    %v252 = vmul.f32 %v231, %v250
    %v253 = vmul.f32 %v233, %v251
    %v254 = vsel %vm219, %v247, 0.0
    %255 = vadd.xlane.f32.xlu0 %v254
    %v256 = vpop.xlane.xlu0 %255
    %v257 = vsel %vm219, %v249, 0.0
    %258 = vadd.xlane.f32.xlu0 %v257
    %v259 = vpop.xlane.xlu0 %258
    %v260 = vadd.f32 %v252, %v256
    %v261 = vadd.f32 %v253, %v259
    %vm262 = vcmask 7168
    %263 = vst.msk [vmem:[#allocation3] sm:$0xff] %vm262, %v260
    %264 = vst.msk [vmem:[#allocation3 + $0x8] sm:$0xff] %vm262, %v261
    %v265 = vld [vmem:[#allocation4] sm:$0xff]
    %v266 = vld [vmem:[#allocation4 + $0x8] sm:$0xff]
    %268 = vset.pattern.permute.xlu0 0
    %269 = vperm.xlu0 %268, %v231
    %v270 = vpop.permute.xlu0 %269
    %273 = vset.pattern.permute.xlu0 0
    %274 = vperm.xlu0 %273, %v233
    %v275 = vpop.permute.xlu0 %274
    %v277 = vmul.f32 %v270, %v265
    %v278 = vmul.f32 %v275, %v266
    %v280 = vsel %vm219, %v247, 0
    %282 = vmatprep.subr.mxu0 0.0
    %283 = vmatpush1.msra.mxu0 %v52
    %284 = vmatprep.subr.mxu0 0.0
    %285 = vmatpush1.msra.mxu0 %v53
    %286 = vmatprep.subr.mxu0 0.0
    %287 = vmatpush1.msra.mxu0 0.0
    %288 = vmatprep.subr.mxu0 0.0
    %289 = vmatpush1.msra.mxu0 0.0
    %290 = vmatprep.subr.mxu0 0.0
    %291 = vmatpush1.msra.mxu0 0.0
    %292 = vmatprep.subr.mxu0 0.0
    %293 = vmatpush1.msra.mxu0 0.0
    %294 = vmatprep.subr.mxu0 0.0
    %295 = vmatpush1.msra.mxu0 0.0
    %296 = vmatprep.subr.mxu0 0.0
    %297 = vmatpush1.msra.mxu0 0.0
    %298 = vmatprep.subr.mxu0 0.0
    %299 = vmatpush1.msra.mxu0 0.0
    %300 = vmatprep.subr.mxu0 0.0
    %301 = vmatpush1.msra.mxu0 0.0
    %302 = vmatprep.subr.mxu0 0.0
    %303 = vmatpush1.msra.mxu0 0.0
    %304 = vmatprep.subr.mxu0 0.0
    %305 = vmatpush1.msra.mxu0 0.0
    %306 = vmatprep.subr.mxu0 0.0
    %307 = vmatpush1.msra.mxu0 0.0
    %308 = vmatprep.subr.mxu0 0.0
    %309 = vmatpush1.msra.mxu0 0.0
    %310 = vmatprep.subr.mxu0 0.0
    %311 = vmatpush1.msra.mxu0 0.0
    %312 = vmatprep.subr.mxu0 0.0
    %313 = vmatpush1.msra.mxu0 0.0
    %314 = vmatprep.subr.mxu0 0.0
    %315 = vmatpush1.msra.mxu0 0.0
    %316 = vmatprep.subr.mxu0 0.0
    %317 = vmatpush1.msra.mxu0 0.0
    %318 = vmatprep.subr.mxu0 0.0
    %319 = vmatpush1.msra.mxu0 0.0
    %320 = vmatprep.subr.mxu0 0.0
    %321 = vmatpush1.msra.mxu0 0.0
    %322 = vmatprep.subr.mxu0 0.0
    %323 = vmatpush1.msra.mxu0 0.0
    %324 = vmatprep.subr.mxu0 0.0
    %325 = vmatpush1.msra.mxu0 0.0
    %326 = vmatprep.subr.mxu0 0.0
    %327 = vmatpush1.msra.mxu0 0.0
    %328 = vmatprep.subr.mxu0 0.0
    %329 = vmatpush1.msra.mxu0 0.0
    %330 = vmatprep.subr.mxu0 0.0
    %331 = vmatpush1.msra.mxu0 0.0
    %332 = vmatprep.subr.mxu0 0.0
    %333 = vmatpush1.msra.mxu0 0.0
    %334 = vmatprep.subr.mxu0 0.0
    %335 = vmatpush1.msra.mxu0 0.0
    %336 = vmatprep.subr.mxu0 0.0
    %337 = vmatpush1.msra.mxu0 0.0
    %338 = vmatprep.subr.mxu0 0.0
    %339 = vmatpush1.msra.mxu0 0.0
    %340 = vmatprep.subr.mxu0 0.0
    %341 = vmatpush1.msra.mxu0 0.0
    %342 = vmatprep.subr.mxu0 0.0
    %343 = vmatpush1.msra.mxu0 0.0
    %344 = vmatprep.subr.mxu0 0.0
    %345 = vmatpush1.msra.mxu0 0.0
    %346 = vmatprep.mubr.f32.mxu0 0.0
    %347 = vmatmul.mubr.f32.gmra.mrb[0].mxu0 %v280
    %v348 = vpop.f32.mrb[0].mxu0
    %v349 = vadd.f32 0.0, %v348
    %v350 = vpop.f32.mrb[0].mxu0
    %351 = vdwg.mxu0
    %v353 = vsel %vm219, %v249, 0
    %355 = vmatprep.subr.mxu0 0.0
    %356 = vmatpush1.msra.mxu0 %v54
    %357 = vmatprep.subr.mxu0 0.0
    %358 = vmatpush1.msra.mxu0 %v55
    %359 = vmatprep.subr.mxu0 0.0
    %360 = vmatpush1.msra.mxu0 0.0
    %361 = vmatprep.subr.mxu0 0.0
    %362 = vmatpush1.msra.mxu0 0.0
    %363 = vmatprep.subr.mxu0 0.0
    %364 = vmatpush1.msra.mxu0 0.0
    %365 = vmatprep.subr.mxu0 0.0
    %366 = vmatpush1.msra.mxu0 0.0
    %367 = vmatprep.subr.mxu0 0.0
    %368 = vmatpush1.msra.mxu0 0.0
    %369 = vmatprep.subr.mxu0 0.0
    %370 = vmatpush1.msra.mxu0 0.0
    %371 = vmatprep.subr.mxu0 0.0
    %372 = vmatpush1.msra.mxu0 0.0
    %373 = vmatprep.subr.mxu0 0.0
    %374 = vmatpush1.msra.mxu0 0.0
    %375 = vmatprep.subr.mxu0 0.0
    %376 = vmatpush1.msra.mxu0 0.0
    %377 = vmatprep.subr.mxu0 0.0
    %378 = vmatpush1.msra.mxu0 0.0
    %379 = vmatprep.subr.mxu0 0.0
    %380 = vmatpush1.msra.mxu0 0.0
    %381 = vmatprep.subr.mxu0 0.0
    %382 = vmatpush1.msra.mxu0 0.0
    %383 = vmatprep.subr.mxu0 0.0
    %384 = vmatpush1.msra.mxu0 0.0
    %385 = vmatprep.subr.mxu0 0.0
    %386 = vmatpush1.msra.mxu0 0.0
    %387 = vmatprep.subr.mxu0 0.0
    %388 = vmatpush1.msra.mxu0 0.0
    %389 = vmatprep.subr.mxu0 0.0
    %390 = vmatpush1.msra.mxu0 0.0
    %391 = vmatprep.subr.mxu0 0.0
    %392 = vmatpush1.msra.mxu0 0.0
    %393 = vmatprep.subr.mxu0 0.0
    %394 = vmatpush1.msra.mxu0 0.0
    %395 = vmatprep.subr.mxu0 0.0
    %396 = vmatpush1.msra.mxu0 0.0
    %397 = vmatprep.subr.mxu0 0.0
    %398 = vmatpush1.msra.mxu0 0.0
    %399 = vmatprep.subr.mxu0 0.0
    %400 = vmatpush1.msra.mxu0 0.0
    %401 = vmatprep.subr.mxu0 0.0
    %402 = vmatpush1.msra.mxu0 0.0
    %403 = vmatprep.subr.mxu0 0.0
    %404 = vmatpush1.msra.mxu0 0.0
    %405 = vmatprep.subr.mxu0 0.0
    %406 = vmatpush1.msra.mxu0 0.0
    %407 = vmatprep.subr.mxu0 0.0
    %408 = vmatpush1.msra.mxu0 0.0
    %409 = vmatprep.subr.mxu0 0.0
    %410 = vmatpush1.msra.mxu0 0.0
    %411 = vmatprep.subr.mxu0 0.0
    %412 = vmatpush1.msra.mxu0 0.0
    %413 = vmatprep.subr.mxu0 0.0
    %414 = vmatpush1.msra.mxu0 0.0
    %415 = vmatprep.subr.mxu0 0.0
    %416 = vmatpush1.msra.mxu0 0.0
    %417 = vmatprep.subr.mxu0 0.0
    %418 = vmatpush1.msra.mxu0 0.0
    %419 = vmatprep.mubr.f32.mxu0 0.0
    %420 = vmatmul.mubr.f32.gmra.mrb[0].mxu0 %v353
    %v421 = vpop.f32.mrb[0].mxu0
    %v422 = vadd.f32 0.0, %v421
    %v423 = vpop.f32.mrb[0].mxu0
    %424 = vdwg.mxu0
    %v425 = vadd.f32 %v277, %v349
    %v426 = vadd.f32 %v278, %v422
    %427 = vst.msk [vmem:[#allocation4] sm:$0xff] %vm58, %v425
    %428 = vst.msk [vmem:[#allocation4 + $0x8] sm:$0xff] %vm58, %v426
    %429 = vst.msk [vmem:[#allocation2] sm:$0xff] %vm262, %v226
    %430 = vst.msk [vmem:[#allocation2 + $0x8] sm:$0xff] %vm262, %v227
    // Predicated region
    $region22: #{tpu_custom_call.1} parent=1 // pred_check
      %p431 = pneg %p40
    $region23: #{tpu_custom_call.1} parent=1 // pred_check_branch
      %433 = sbr.rel (%p431) target = $region25
    $region24: #{tpu_custom_call.1} parent=1 // pred_region
      %v434 = vld [vmem:[#allocation4] sm:$0xff]
      %v435 = vld [vmem:[#allocation4 + $0x8] sm:$0xff]
      %v436 = vld [vmem:[#allocation3] sm:$0xff]
      %v437 = vld [vmem:[#allocation3 + $0x8] sm:$0xff]
      %v438 = vrcp.pop %v436
      %v439 = vrcp.pop %v437
      %441 = vset.pattern.permute.xlu0 0
      %442 = vperm.xlu0 %441, %v438
      %v443 = vpop.permute.xlu0 %442
      %446 = vset.pattern.permute.xlu0 0
      %447 = vperm.xlu0 %446, %v439
      %v448 = vpop.permute.xlu0 %447
      %v450 = vmul.f32 %v434, %v443
      %v451 = vmul.f32 %v435, %v448
      %v452 = vcombine.high %v450, 0.0
      %v454 = vunpack.c.l.s4 1983009808
      %v455 = vunpack.c.0.s8 %v454
      %v456 = vlaneseq
      %v457 = vshrl.u32 %v456, 7
      %v458 = vsub.s32 %v455, %v457
      %v459 = vrot.slane %v450, %v458
      %v461 = vunpack.c.l.s4 1983009808
      %v462 = vunpack.c.0.s8 %v461
      %v463 = vlaneseq
      %v464 = vshrl.u32 %v463, 7
      %v465 = vsub.s32 %v462, %v464
      %v466 = vrot.slane %v452, %v465
      %v467 = vcombine.high %v451, 0.0
      %v469 = vunpack.c.l.s4 1983009808
      %v470 = vunpack.c.0.s8 %v469
      %v471 = vlaneseq
      %v472 = vshrl.u32 %v471, 7
      %v473 = vsub.s32 %v470, %v472
      %v474 = vrot.slane %v451, %v473
      %v476 = vunpack.c.l.s4 1983009808
      %v477 = vunpack.c.0.s8 %v476
      %v478 = vlaneseq
      %v479 = vshrl.u32 %v478, 7
      %v480 = vsub.s32 %v477, %v479
      %v481 = vrot.slane %v467, %v480
      %v482 = vcombine.low %v459, %v474
      %v483 = vcombine.high %v459, %v474
      %v485 = vunpack.c.l.s4 1934713408
      %v486 = vunpack.c.0.s8 %v485
      %v487 = vlaneseq
      %v488 = vshrl.u32 %v487, 7
      %v489 = vsub.s32 %v486, %v488
      %v490 = vrot.slane %v482, %v489
      %v492 = vunpack.c.l.s4 1934713408
      %v493 = vunpack.c.0.s8 %v492
      %v494 = vlaneseq
      %v495 = vshrl.u32 %v494, 7
      %v496 = vsub.s32 %v493, %v495
      %v497 = vrot.slane %v483, %v496
      %v498 = vcombine.low %v466, %v481
      %v499 = vcombine.high %v466, %v481
      %v501 = vunpack.c.l.s4 1934713408
      %v502 = vunpack.c.0.s8 %v501
      %v503 = vlaneseq
      %v504 = vshrl.u32 %v503, 7
      %v505 = vsub.s32 %v502, %v504
      %v506 = vrot.slane %v498, %v505
      %v508 = vunpack.c.l.s4 1934713408
      %v509 = vunpack.c.0.s8 %v508
      %v510 = vlaneseq
      %v511 = vshrl.u32 %v510, 7
      %v512 = vsub.s32 %v509, %v511
      %v513 = vrot.slane %v499, %v512
      %v514 = vcombine.high %v490, 0.0
      %v515 = vcombine.high %v497, 0.0
      %v516 = vcombine.high %v506, 0.0
      %v517 = vcombine.high %v513, 0.0
      %519 = vrot.lane.b32.xlu0 %v514, 32
      %v520 = vpop.permute.xlu0 %519
      %523 = vrot.lane.b32.xlu0 %v497, 64
      %v524 = vpop.permute.xlu0 %523
      %527 = vrot.lane.b32.xlu0 %v515, 96
      %v528 = vpop.permute.xlu0 %527
      %531 = vrot.lane.b32.xlu0 %v516, 32
      %v532 = vpop.permute.xlu0 %531
      %535 = vrot.lane.b32.xlu0 %v513, 64
      %v536 = vpop.permute.xlu0 %535
      %539 = vrot.lane.b32.xlu0 %v517, 96
      %v540 = vpop.permute.xlu0 %539
      %v542 = vsel %vm58, %v490, %v520
      %vm543 = vcmask 523264
      %v544 = vsel %vm543, %v542, %v524
      %vm545 = vcmask 785408
      %v546 = vsel %vm545, %v544, %v528
      %v547 = vsel %vm58, %v506, %v532
      %v548 = vsel %vm543, %v547, %v536
      %v549 = vsel %vm545, %v548, %v540
      %v552 = vcombine.low %v546, %v549
      %v554 = vunpack.c.l.s4 1983009808
      %v555 = vunpack.c.0.s8 %v554
      %v556 = vlaneseq
      %v557 = vshrl.u32 %v556, 7
      %v558 = vsub.s32 %v555, %v557
      %v559 = vrot.slane %v552, %v558
      %561 = vst [vmem:[#allocation10] sm:$0xf] %v559
    $region25: #{tpu_custom_call.1} parent=1 // pred_fallthru
      _
    // Predicated region
    $region26: #{tpu_custom_call.1} parent=1 // pred_check
      _
    $region27: #{tpu_custom_call.1} parent=1 // pred_check_branch
      %563 = sbr.rel (0) target = $region29
    $region28: #{tpu_custom_call.1} parent=1 // pred_region
      %s565 = ssub.s32 64, 64
      %566 = vsyncadd [#allocation7], %s565
      %s568 = sshll.u32 [#allocation10], 4
      %s569 = int_to_ptr.vmem [resolvable:$true] %s568
      %571 = dma.vmem_to_hbm [thread:$0]  %s569, 64, %s2, [#allocation7]
    $region29: #{tpu_custom_call.1} parent=1 // pred_fallthru
      _
    // Predicated region
    $region30: #{tpu_custom_call.1} parent=1 // pred_check
      _
    $region31: #{tpu_custom_call.1} parent=1 // pred_check_branch
      %573 = sbr.rel (0) target = $region33
    $region32: #{tpu_custom_call.1} parent=1 // pred_region
      %574 = dma.done [#allocation7], 64
    $region33: #{tpu_custom_call.1} parent=1 // pred_fallthru
      _
    %575 = vsyncpa [#allocation6], 1
    %576 = vsyncpa [#allocation9], 1
    %577 = vsyncpa [#allocation7], 1

</llo_original>
